<compile_context>
chip_gen: v7x
topology: tpu7x:2x2x1
jax: 0.10.0
libtpu: 0.0.40
codegen_flags: <defaults>
</compile_context>

<pallas_src>
import jax
import jax.numpy as jnp
from jax.experimental import pallas as pl
from jax.experimental.pallas import tpu as pltpu

_NEG = -1e30  # pad-column bias value -> exp underflows to exactly 0 probability


def _round_up(x, m):
    return ((x + m - 1) // m) * m


def _pad2(a, rows, cols, fill=0.0):
    r, c = a.shape
    return jnp.pad(a, ((0, rows - r), (0, cols - c)), constant_values=fill)


def _softmax(y):
    # Exact normalization: the epilogue runs once per call, so the exact divide is
    # free, and (unlike approx reciprocal) the rows sum to 1 to f32 rounding.
    m = jnp.max(y, axis=-1, keepdims=True)
    e = jnp.exp(y - m)
    return e / jnp.sum(e, axis=-1, keepdims=True)


# --------------------------------------------------------------------------- kernel
def qswitch_kernel(x_ref, w1_ref, s1_ref, b1_ref, w2_ref, b2_ref, w3_ref, b3_ref,
                   out_ref, acc_ref):
    k = pl.program_id(0)

    @pl.when(k == 0)
    def _init():
        acc_ref[...] = jnp.zeros_like(acc_ref)

    # Layer-1 partial GEMM: (Bp, tk) @ (tk, H1p) with f32 accumulation on the MXU.
    x = x_ref[...]
    w = w1_ref[...]
    if w.dtype != x.dtype:          # int8-streamed w1: cheap VPU upcast in VMEM
        w = w.astype(x.dtype)
    acc_ref[...] += jnp.dot(x, w, preferred_element_type=jnp.float32)

    @pl.when(k == pl.num_programs(0) - 1)
    def _finalize():
        # Dequant scale must be applied BEFORE the -1e30 bias trick.
        f1 = _softmax(acc_ref[...] * s1_ref[...] + b1_ref[...])
        f2 = _softmax(jnp.dot(f1, w2_ref[...],
                              preferred_element_type=jnp.float32) + b2_ref[...])
        f3 = _softmax(jnp.dot(f2, w3_ref[...],
                              preferred_element_type=jnp.float32) + b3_ref[...])
        out_ref[...] = f3.astype(out_ref.dtype)


# --------------------------------------------------------------------- host helpers
def _device_kind():
    try:
        return jax.devices()[0].device_kind.lower()
    except Exception:
        return ""


def _vmem_limit_bytes():
    try:
        cap = pltpu.get_tpu_info().vmem_capacity_bytes
        return int(min(cap * 3 // 4, 96 << 20))
    except Exception:
        pass
    kind = _device_kind()
    if "v5" in kind or "v6" in kind:
        return 96 << 20
    return 48 << 20       # conservative fallback: safe on v7x's 64 MiB physical VMEM


def _default_tk_target():
    kind = _device_kind()
    if "v5" in kind or "v6" in kind:
        return 32768      # 128 MiB physical VMEM: fewer, bigger K steps
    return 16384          # v7x (64 MiB) / unknown: keep double-buffered w1 tiles modest


def _choose_k_tiling(d_in, tk_target):
    """tk % 128 == 0, Dp = nk * tk >= d_in, K-pad waste bounded by nk*128 rows."""
    d128 = _round_up(d_in, 128)
    tk_target = max(128, _round_up(min(int(tk_target), d128), 128))
    nk = int(pl.cdiv(d128, tk_target))
    tk = _round_up(int(pl.cdiv(d128, nk)), 128)
    return tk, nk * tk, nk


def _quantize_w1(w1):
    """Symmetric per-output-column int8 quantization (shared by kernel & reference)."""
    amax = jnp.max(jnp.abs(w1), axis=0, keepdims=True)
    scale = jnp.where(amax > 0, amax / 127.0, 1.0).astype(jnp.float32)
    w1q = jnp.clip(jnp.round(w1 / scale), -127.0, 127.0)
    return w1q, scale


def prepare_params(params, *, stream_dtype=jnp.bfloat16, tk=None):
    """One-time pad / cast / quantize of the weights.  Hoisted out of the forward path
    so the huge fc1 weight is never re-padded / re-cast per call."""
    w1, b1, w2, b2, w3, b3 = params
    d_in, h1 = w1.shape
    h2, n_out = w2.shape[1], w3.shape[1]
    H1p, H2p, Np = _round_up(h1, 128), _round_up(h2, 128), _round_up(n_out, 128)
    tk, Dp, nk = _choose_k_tiling(d_in, tk if tk is not None else _default_tk_target())

    if jnp.dtype(stream_dtype) == jnp.dtype(jnp.int8):
        w1q, scale = _quantize_w1(w1)
        w1p = _pad2(w1q, Dp, H1p).astype(jnp.int8)
        s1p = _pad2(scale, 1, H1p, fill=1.0).astype(jnp.float32)
        x_dtype = jnp.bfloat16
    else:
        # TODO(synk): on v7x an fp8(e4m3) w1 stream would halve traffic vs bf16.
        w1p = _pad2(w1, Dp, H1p).astype(stream_dtype)
        s1p = jnp.ones((1, H1p), jnp.float32)
        x_dtype = stream_dtype

    b1p = _pad2(b1, 1, H1p, fill=_NEG).astype(jnp.float32)
    w2p = _pad2(w2, H1p, H2p).astype(jnp.float32)
    b2p = _pad2(b2, 1, H2p, fill=_NEG).astype(jnp.float32)
    w3p = _pad2(w3, H2p, Np).astype(jnp.float32)
    b3p = _pad2(b3, 1, Np, fill=_NEG).astype(jnp.float32)

    cfg = dict(d_in=d_in, n_out=n_out, Dp=Dp, tk=tk, nk=nk,
               H1p=H1p, H2p=H2p, Np=Np, x_dtype=x_dtype)
    return (w1p, s1p, b1p, w2p, b2p, w3p, b3p), cfg


def qswitch_forward(x, prepared, cfg):
    """x: (B, d_in) f32.  Returns (B, n_outputs) f32 probabilities."""
    w1p, s1p, b1p, w2p, b2p, w3p, b3p = prepared
    B = x.shape[0]
    tk, nk, Dp = cfg["tk"], cfg["nk"], cfg["Dp"]
    H1p, H2p, Np = cfg["H1p"], cfg["H2p"], cfg["Np"]
    x_dtype = cfg["x_dtype"]

    # sub-32-bit x packs (16,128) per vreg -> pad the batch to 16 so tiles stay dense.
    sub = 8 if jnp.dtype(x_dtype).itemsize == 4 else 16
    Bp = _round_up(max(B, 1), sub)
    xp = _pad2(x, Bp, Dp).astype(x_dtype)

    def _nbytes(a):
        return int(a.size) * jnp.dtype(a.dtype).itemsize

    cost = pl.CostEstimate(
        flops=int(2 * Bp * (Dp * H1p + H1p * H2p + H2p * Np)),
        transcendentals=int(Bp * (H1p + H2p + Np)),
        bytes_accessed=int(_nbytes(xp) + sum(_nbytes(a) for a in prepared)
                           + Bp * Np * 4),
    )

    grid_spec = pltpu.PrefetchScalarGridSpec(
        num_scalar_prefetch=0,
        grid=(nk,),
        in_specs=[
            pl.BlockSpec((Bp, tk), lambda k: (0, k)),     # x  : K-streamed
            pl.BlockSpec((tk, H1p), lambda k: (k, 0)),    # w1 : K-streamed (dominant)
            pl.BlockSpec((1, H1p), lambda k: (0, 0)),     # s1 : dequant scale, resident
            pl.BlockSpec((1, H1p), lambda k: (0, 0)),     # b1 : resident
            pl.BlockSpec((H1p, H2p), lambda k: (0, 0)),   # w2 : resident
            pl.BlockSpec((1, H2p), lambda k: (0, 0)),     # b2
            pl.BlockSpec((H2p, Np), lambda k: (0, 0)),    # w3
            pl.BlockSpec((1, Np), lambda k: (0, 0)),      # b3
        ],
        out_specs=pl.BlockSpec((Bp, Np), lambda k: (0, 0)),
        scratch_shapes=[pltpu.VMEM((Bp, H1p), jnp.float32)],   # layer-1 f32 accumulator
    )

    out = pl.pallas_call(
        qswitch_kernel,
        out_shape=jax.ShapeDtypeStruct((Bp, Np), jnp.float32),
        grid_spec=grid_spec,
        compiler_params=pltpu.CompilerParams(
            dimension_semantics=("arbitrary",),           # K is a reduction axis
            vmem_limit_bytes=_vmem_limit_bytes(),
        ),
        cost_estimate=cost,
    )(xp, w1p, s1p, b1p, w2p, b2p, w3p, b3p)

    return out[:B, :cfg["n_out"]]


# ---------------------------------------------------------------- params & reference
def init_params(key, d_in, h1, h2, n_outputs):
    """Matches the module: weights ~ U[0,1) (nn.init.uniform_), biases ~ default Linear
    init U[-1/sqrt(fan_in), 1/sqrt(fan_in)].  Stored as (in, out)."""
    ks = jax.random.split(key, 6)

    def bias(k, fan_in, n):
        bound = 1.0 / jnp.sqrt(jnp.float32(fan_in))
        return jax.random.uniform(k, (1, n), jnp.float32, -bound, bound)

    w1 = jax.random.uniform(ks[0], (d_in, h1), jnp.float32)
    b1 = bias(ks[1], d_in, h1)
    w2 = jax.random.uniform(ks[2], (h1, h2), jnp.float32)
    b2 = bias(ks[3], h1, h2)
    w3 = jax.random.uniform(ks[4], (h2, n_outputs), jnp.float32)
    b3 = bias(ks[5], h2, n_outputs)
    return w1, b1, w2, b2, w3, b3


def reference_forward(x, params, *, stream_dtype=jnp.float32):
    """Pure-JAX reference mirroring the kernel's layer-1 streaming dtype."""
    w1, b1, w2, b2, w3, b3 = params
    if jnp.dtype(stream_dtype) == jnp.dtype(jnp.int8):
        w1q, scale = _quantize_w1(w1)
        y1 = jnp.dot(x.astype(jnp.bfloat16), w1q.astype(jnp.bfloat16),
                     preferred_element_type=jnp.float32) * scale + b1
    else:
        y1 = jnp.dot(x.astype(stream_dtype), w1.astype(stream_dtype),
                     preferred_element_type=jnp.float32) + b1
    f1 = jax.nn.softmax(y1, axis=-1)
    f2 = jax.nn.softmax(f1 @ w2 + b2, axis=-1)
    f3 = jax.nn.softmax(f2 @ w3 + b3, axis=-1)
    return f3


if __name__ == "__main__":
    B = 2
    D_IN = 1024          # small stand-in for the module's 16*121*121 = 234256
    H1, H2 = 200, 50
    N_OUTPUTS = 10
    TK = 256             # 4 K-steps -> exercises the streamed / accumulate path

    key = jax.random.PRNGKey(0)
    k_x, k_p = jax.random.split(key)
    x = jax.random.uniform(k_x, (B, D_IN), jnp.float32)
    params = init_params(k_p, D_IN, H1, H2, N_OUTPUTS)

    # Weight preparation is done ONCE (hoisted out of the forward path).
    for mode in (jnp.float32, jnp.bfloat16, jnp.int8):
        prepared, cfg = prepare_params(params, stream_dtype=mode, tk=TK)
        out = jax.block_until_ready(qswitch_forward(x, prepared, cfg))
        ref = reference_forward(x, params, stream_dtype=mode)
        assert out.shape == (B, N_OUTPUTS)
        assert bool(jnp.all(jnp.isfinite(out))), f"{mode}: non-finite output"
        assert bool(jnp.allclose(jnp.sum(out, axis=-1), 1.0, atol=1e-3)), \
            f"{mode}: rows do not sum to 1"
        assert bool(jnp.allclose(out, ref, atol=5e-3, rtol=1e-2)), \
            f"{mode}: mismatch vs reference"

    print("KERNEL_OK")
</pallas_src>

<mosaic_0001>
module attributes {stable_mosaic.version = 11 : i64} {
  func.func @qswitch_kernel(%arg0: i32, %arg1: memref<8x256xf32, #tpu.memory_space<vmem>>, %arg2: memref<256x256xf32, #tpu.memory_space<vmem>>, %arg3: memref<1x256xf32, #tpu.memory_space<vmem>>, %arg4: memref<1x256xf32, #tpu.memory_space<vmem>>, %arg5: memref<256x128xf32, #tpu.memory_space<vmem>>, %arg6: memref<1x128xf32, #tpu.memory_space<vmem>>, %arg7: memref<128x128xf32, #tpu.memory_space<vmem>>, %arg8: memref<1x128xf32, #tpu.memory_space<vmem>>, %arg9: memref<8x128xf32, #tpu.memory_space<vmem>>, %arg10: memref<8x256xf32, #tpu.memory_space<vmem>>) attributes {dimension_semantics = [#tpu.dimension_semantics<arbitrary>], iteration_bounds = array<i64: 4>, scalar_prefetch = 0 : i64, scratch_operands = 1 : i64, tpu.core_type = #tpu.core_type<tc>, window_params = [{transform_indices = @transform_0, window_bounds = array<i64: 8, 256>}, {transform_indices = @transform_1, window_bounds = array<i64: 256, 256>}, {pipeline_mode = #tpu.pipeline_mode<synchronous>, transform_indices = @transform_2, window_bounds = array<i64: 1, 256>}, {pipeline_mode = #tpu.pipeline_mode<synchronous>, transform_indices = @transform_3, window_bounds = array<i64: 1, 256>}, {pipeline_mode = #tpu.pipeline_mode<synchronous>, transform_indices = @transform_4, window_bounds = array<i64: 256, 128>}, {pipeline_mode = #tpu.pipeline_mode<synchronous>, transform_indices = @transform_5, window_bounds = array<i64: 1, 128>}, {pipeline_mode = #tpu.pipeline_mode<synchronous>, transform_indices = @transform_6, window_bounds = array<i64: 128, 128>}, {pipeline_mode = #tpu.pipeline_mode<synchronous>, transform_indices = @transform_7, window_bounds = array<i64: 1, 128>}, {pipeline_mode = #tpu.pipeline_mode<synchronous>, transform_indices = @transform_8, window_bounds = array<i64: 8, 128>}]} {
    %c0_i32 = arith.constant 0 : i32
    %0 = arith.cmpi eq, %arg0, %c0_i32 : i32
    %1 = arith.extui %0 : i1 to i32
    %c0_i32_0 = arith.constant 0 : i32
    %2 = arith.cmpi ne, %1, %c0_i32_0 : i32
    scf.if %2 {
      %cst_9 = arith.constant 0.000000e+00 : f32
      %12 = vector.broadcast %cst_9 : f32 to vector<8x256xf32>
      %c0_10 = arith.constant 0 : index
      %c0_11 = arith.constant 0 : index
      %13 = vector.load %arg10[%c0_10, %c0_11] : memref<8x256xf32, #tpu.memory_space<vmem>>, vector<8x256xf32>
      tpu.vector_store %arg10[%c0_10, %c0_11], %12 {strides = array<i32>} : memref<8x256xf32, #tpu.memory_space<vmem>>, vector<8x256xf32>,
    } else {
    }
    %c0 = arith.constant 0 : index
    %c0_1 = arith.constant 0 : index
    %3 = vector.load %arg1[%c0, %c0_1] : memref<8x256xf32, #tpu.memory_space<vmem>>, vector<8x256xf32>
    %c0_2 = arith.constant 0 : index
    %c0_3 = arith.constant 0 : index
    %4 = vector.load %arg2[%c0_2, %c0_3] : memref<256x256xf32, #tpu.memory_space<vmem>>, vector<256x256xf32>
    %c0_4 = arith.constant 0 : index
    %c0_5 = arith.constant 0 : index
    %5 = vector.load %arg10[%c0_4, %c0_5] : memref<8x256xf32, #tpu.memory_space<vmem>>, vector<8x256xf32>
    %cst = arith.constant dense<0.000000e+00> : vector<8x256xf32>
    %6 = tpu.matmul %3, %4, %cst {dimension_numbers = #tpu.dot_dimension_numbers<[1], [0], [0], [1], [0, 0, 1, 1], [], []>} : vector<8x256xf32>, vector<256x256xf32>, vector<8x256xf32> -> vector<8x256xf32>
    %7 = arith.addf %5, %6 : vector<8x256xf32>
    %c0_6 = arith.constant 0 : index
    %c0_7 = arith.constant 0 : index
    %8 = vector.load %arg10[%c0_6, %c0_7] : memref<8x256xf32, #tpu.memory_space<vmem>>, vector<8x256xf32>
    tpu.vector_store %arg10[%c0_6, %c0_7], %7 {strides = array<i32>} : memref<8x256xf32, #tpu.memory_space<vmem>>, vector<8x256xf32>,
    %c3_i32 = arith.constant 3 : i32
    %9 = arith.cmpi eq, %arg0, %c3_i32 : i32
    %10 = arith.extui %9 : i1 to i32
    %c0_i32_8 = arith.constant 0 : i32
    %11 = arith.cmpi ne, %10, %c0_i32_8 : i32
    scf.if %11 {
      %c0_9 = arith.constant 0 : index
      %c0_10 = arith.constant 0 : index
      %12 = vector.load %arg10[%c0_9, %c0_10] : memref<8x256xf32, #tpu.memory_space<vmem>>, vector<8x256xf32>
      %c0_11 = arith.constant 0 : index
      %c0_12 = arith.constant 0 : index
      %13 = vector.load %arg3[%c0_11, %c0_12] : memref<1x256xf32, #tpu.memory_space<vmem>>, vector<1x256xf32>
      %14 = vector.broadcast %13 : vector<1x256xf32> to vector<8x256xf32>
      %15 = arith.mulf %12, %14 : vector<8x256xf32>
      %c0_13 = arith.constant 0 : index
      %c0_14 = arith.constant 0 : index
      %16 = vector.load %arg4[%c0_13, %c0_14] : memref<1x256xf32, #tpu.memory_space<vmem>>, vector<1x256xf32>
      %17 = vector.broadcast %16 : vector<1x256xf32> to vector<8x256xf32>
      %18 = arith.addf %15, %17 : vector<8x256xf32>
      %cst_15 = arith.constant dense<0xFF800000> : vector<8xf32>
      %19 = vector.multi_reduction <maximumf>, %18, %cst_15 [1] : vector<8x256xf32> to vector<8xf32>
      %20 = vector.shape_cast %19 : vector<8xf32> to vector<8x1xf32>
      %21 = vector.broadcast %20 : vector<8x1xf32> to vector<8x256xf32>
      %22 = arith.subf %18, %21 : vector<8x256xf32>
      %23 = math.exp %22 : vector<8x256xf32>
      %cst_16 = arith.constant dense<0.000000e+00> : vector<8xf32>
      %24 = vector.multi_reduction <add>, %23, %cst_16 [1] : vector<8x256xf32> to vector<8xf32>
      %25 = vector.shape_cast %24 : vector<8xf32> to vector<8x1xf32>
      %26 = vector.broadcast %25 : vector<8x1xf32> to vector<8x256xf32>
      %27 = arith.divf %23, %26 : vector<8x256xf32>
      %c0_17 = arith.constant 0 : index
      %c0_18 = arith.constant 0 : index
      %28 = vector.load %arg5[%c0_17, %c0_18] : memref<256x128xf32, #tpu.memory_space<vmem>>, vector<256x128xf32>
      %cst_19 = arith.constant dense<0.000000e+00> : vector<8x128xf32>
      %29 = tpu.matmul %27, %28, %cst_19 {dimension_numbers = #tpu.dot_dimension_numbers<[1], [0], [0], [1], [0, 0, 1, 1], [], []>} : vector<8x256xf32>, vector<256x128xf32>, vector<8x128xf32> -> vector<8x128xf32>
      %c0_20 = arith.constant 0 : index
      %c0_21 = arith.constant 0 : index
      %30 = vector.load %arg6[%c0_20, %c0_21] : memref<1x128xf32, #tpu.memory_space<vmem>>, vector<1x128xf32>
      %31 = vector.broadcast %30 : vector<1x128xf32> to vector<8x128xf32>
      %32 = arith.addf %29, %31 : vector<8x128xf32>
      %cst_22 = arith.constant dense<0xFF800000> : vector<8xf32>
      %33 = vector.multi_reduction <maximumf>, %32, %cst_22 [1] : vector<8x128xf32> to vector<8xf32>
      %34 = vector.shape_cast %33 : vector<8xf32> to vector<8x1xf32>
      %35 = vector.broadcast %34 : vector<8x1xf32> to vector<8x128xf32>
      %36 = arith.subf %32, %35 : vector<8x128xf32>
      %37 = math.exp %36 : vector<8x128xf32>
      %cst_23 = arith.constant dense<0.000000e+00> : vector<8xf32>
      %38 = vector.multi_reduction <add>, %37, %cst_23 [1] : vector<8x128xf32> to vector<8xf32>
      %39 = vector.shape_cast %38 : vector<8xf32> to vector<8x1xf32>
      %40 = vector.broadcast %39 : vector<8x1xf32> to vector<8x128xf32>
      %41 = arith.divf %37, %40 : vector<8x128xf32>
      %c0_24 = arith.constant 0 : index
      %c0_25 = arith.constant 0 : index
      %42 = vector.load %arg7[%c0_24, %c0_25] : memref<128x128xf32, #tpu.memory_space<vmem>>, vector<128x128xf32>
      %cst_26 = arith.constant dense<0.000000e+00> : vector<8x128xf32>
      %43 = tpu.matmul %41, %42, %cst_26 {dimension_numbers = #tpu.dot_dimension_numbers<[1], [0], [0], [1], [0, 0, 1, 1], [], []>} : vector<8x128xf32>, vector<128x128xf32>, vector<8x128xf32> -> vector<8x128xf32>
      %c0_27 = arith.constant 0 : index
      %c0_28 = arith.constant 0 : index
      %44 = vector.load %arg8[%c0_27, %c0_28] : memref<1x128xf32, #tpu.memory_space<vmem>>, vector<1x128xf32>
      %45 = vector.broadcast %44 : vector<1x128xf32> to vector<8x128xf32>
      %46 = arith.addf %43, %45 : vector<8x128xf32>
      %cst_29 = arith.constant dense<0xFF800000> : vector<8xf32>
      %47 = vector.multi_reduction <maximumf>, %46, %cst_29 [1] : vector<8x128xf32> to vector<8xf32>
      %48 = vector.shape_cast %47 : vector<8xf32> to vector<8x1xf32>
      %49 = vector.broadcast %48 : vector<8x1xf32> to vector<8x128xf32>
      %50 = arith.subf %46, %49 : vector<8x128xf32>
      %51 = math.exp %50 : vector<8x128xf32>
      %cst_30 = arith.constant dense<0.000000e+00> : vector<8xf32>
      %52 = vector.multi_reduction <add>, %51, %cst_30 [1] : vector<8x128xf32> to vector<8xf32>
      %53 = vector.shape_cast %52 : vector<8xf32> to vector<8x1xf32>
      %54 = vector.broadcast %53 : vector<8x1xf32> to vector<8x128xf32>
      %55 = arith.divf %51, %54 : vector<8x128xf32>
      %c0_31 = arith.constant 0 : index
      %c0_32 = arith.constant 0 : index
      %56 = vector.load %arg9[%c0_31, %c0_32] : memref<8x128xf32, #tpu.memory_space<vmem>>, vector<8x128xf32>
      tpu.vector_store %arg9[%c0_31, %c0_32], %55 {strides = array<i32>} : memref<8x128xf32, #tpu.memory_space<vmem>>, vector<8x128xf32>,
    } else {
    }
    return
  }
  func.func @transform_0(%arg0: i32) -> (i32, i32) {
    %c0_i32 = arith.constant 0 : i32
    %c0_i32_0 = arith.constant 0 : i32
    return %c0_i32, %arg0 : i32, i32
  }
  func.func @transform_1(%arg0: i32) -> (i32, i32) {
    %c0_i32 = arith.constant 0 : i32
    %c0_i32_0 = arith.constant 0 : i32
    return %arg0, %c0_i32 : i32, i32
  }
  func.func @transform_2(%arg0: i32) -> (i32, i32) {
    %c0_i32 = arith.constant 0 : i32
    %c0_i32_0 = arith.constant 0 : i32
    %c0_i32_1 = arith.constant 0 : i32
    return %c0_i32, %c0_i32_0 : i32, i32
  }
  func.func @transform_3(%arg0: i32) -> (i32, i32) {
    %c0_i32 = arith.constant 0 : i32
    %c0_i32_0 = arith.constant 0 : i32
    %c0_i32_1 = arith.constant 0 : i32
    return %c0_i32, %c0_i32_0 : i32, i32
  }
  func.func @transform_4(%arg0: i32) -> (i32, i32) {
    %c0_i32 = arith.constant 0 : i32
    %c0_i32_0 = arith.constant 0 : i32
    %c0_i32_1 = arith.constant 0 : i32
    return %c0_i32, %c0_i32_0 : i32, i32
  }
  func.func @transform_5(%arg0: i32) -> (i32, i32) {
    %c0_i32 = arith.constant 0 : i32
    %c0_i32_0 = arith.constant 0 : i32
    %c0_i32_1 = arith.constant 0 : i32
    return %c0_i32, %c0_i32_0 : i32, i32
  }
  func.func @transform_6(%arg0: i32) -> (i32, i32) {
    %c0_i32 = arith.constant 0 : i32
    %c0_i32_0 = arith.constant 0 : i32
    %c0_i32_1 = arith.constant 0 : i32
    return %c0_i32, %c0_i32_0 : i32, i32
  }
  func.func @transform_7(%arg0: i32) -> (i32, i32) {
    %c0_i32 = arith.constant 0 : i32
    %c0_i32_0 = arith.constant 0 : i32
    %c0_i32_1 = arith.constant 0 : i32
    return %c0_i32, %c0_i32_0 : i32, i32
  }
  func.func @transform_8(%arg0: i32) -> (i32, i32) {
    %c0_i32 = arith.constant 0 : i32
    %c0_i32_0 = arith.constant 0 : i32
    %c0_i32_1 = arith.constant 0 : i32
    return %c0_i32, %c0_i32_0 : i32, i32
  }
}

</mosaic_0001>

<llo_original>
// kernel: tpu_custom_call.1
$region0: #{tpu_custom_call.1}
  #allocation0 [shape = 'u32[]', space=smem, size = 0x4, offset = 0x4, fixed_abs, tag = 'smem constant byte address 0x4 - core index']
  #allocation1 [shape = 'u32[144,128]{1,0:T(1,128)}', space=vmem, size = 0x12000, scoped, tag = 'internal scratch']
  #allocation2 [shape = 'f32[8,256]{1,0:T(8,128)}', space=vmem, size = 0x2000, scoped, tag = 'scratch operand']
  %s0 = inlined_call_operand.hbm [shape: f32[8,1024], index: 0, kind: input, shape index: {}]
  %s1 = inlined_call_operand.hbm [shape: f32[1024,256], index: 1, kind: input, shape index: {}]
  %s2 = inlined_call_operand.vmem [shape: f32[1,256], index: 2, kind: input, shape index: {}]
  %s3 = inlined_call_operand.vmem [shape: f32[1,256], index: 3, kind: input, shape index: {}]
  %s4 = inlined_call_operand.hbm [shape: f32[256,128], index: 4, kind: input, shape index: {}]
  %s5 = inlined_call_operand.vmem [shape: f32[1,128], index: 5, kind: input, shape index: {}]
  %s6 = inlined_call_operand.hbm [shape: f32[128,128], index: 6, kind: input, shape index: {}]
  %s7 = inlined_call_operand.vmem [shape: f32[1,128], index: 7, kind: input, shape index: {}]
  %s8 = inlined_call_operand.hbm [shape: f32[8,128], index: 8, kind: output, shape index: {}]
  %s9 = sld [smem:[#allocation0]]
  $region89: #{tpu_custom_call.1} parent=0
    _
  %s11 = ssub.s32 1, %s9
  %s12 = scalar_select 0, %s11, %s9
  $region1: #{tpu_custom_call.1} parent=0
    #allocation3 [shape = 'u8[16384]{0}', space=vmem, size = 0x4000, scoped, tag = 'input window, operand 0']
    #allocation4 [shape = 's32[2]{0}', space=sflag, size = 0x8, scoped, tag = 'scoped memory for tpu_custom_call.1']
    #allocation5 [shape = 's32[2]{0}', space=sflag, size = 0x8, scoped, tag = 'scoped memory for tpu_custom_call.1']
    #allocation6 [shape = 'u8[524288]{0}', space=vmem, size = 0x80000, scoped, tag = 'input window, operand 1']
    #allocation7 [shape = 's32[2]{0}', space=sflag, size = 0x8, scoped, tag = 'scoped memory for tpu_custom_call.1']
    #allocation8 [shape = 'u8[131072]{0}', space=vmem, size = 0x20000, scoped, tag = 'input window, operand 4, single buffered']
    #allocation9 [shape = 'u8[65536]{0}', space=vmem, size = 0x10000, scoped, tag = 'input window, operand 6, single buffered']
    #allocation10 [shape = 's32[1]{0}', space=sflag, size = 0x4, scoped, tag = 'scoped memory for tpu_custom_call.1']
    #allocation11 [shape = 'u8[4096]{0}', space=vmem, size = 0x1000, scoped, tag = 'output window, operand 0, single buffered']
    %13 = vsyncpa [#allocation4], 0
    %s14 = scalar_lea.sflag [#allocation4], 1
    %15 = vsyncpa %s14, 0
    %16 = vsyncpa [#allocation7], 0
    %s17 = scalar_lea.sflag [#allocation7], 1
    %18 = vsyncpa %s17, 0
    %19 = vsyncpa [#allocation10], 0
    %20 = vsyncpa [#allocation5], 0
    loop: start=0, step=1, limit=6
    $region2: #{tpu_custom_call.1} parent=1 // loop_pre_header
      _
    $region3: #{tpu_custom_call.1} parent=1 // loop_header
      %s22 = sphi 0, %s26
      %p23 = scmp.ge.s32.totalorder %s22, 6
      %s32 = sphi 0, %s34
      %s35 = sphi 0, %s32
      %s36 = sphi 0, %s35
      %s52 = sphi 0, %s36
      %s58 = sphi 0, %s60
      %s61 = sphi 0, %s58
      %s62 = sphi 0, %s61
      %s78 = sphi 0, %s62
      %s82 = sphi 0, %s82
      %s84 = sphi 0, %s82
      %s85 = sphi 0, %s84
      %s99 = sphi 0, %s85
      %s103 = sphi 0, %s103
      %s105 = sphi 0, %s103
      %s106 = sphi 0, %s105
      %s120 = sphi 0, %s106
      %s124 = sphi 0, %s124
      %s126 = sphi 0, %s124
      %s127 = sphi 0, %s126
      %s141 = sphi 0, %s127
      %s145 = sphi 0, %s145
      %s147 = sphi 0, %s145
      %s148 = sphi 0, %s147
      %s162 = sphi 0, %s148
      %s166 = sphi 0, %s166
      %s168 = sphi 0, %s166
      %s169 = sphi 0, %s168
      %s183 = sphi 0, %s169
      %s187 = sphi 0, %s187
      %s189 = sphi 0, %s187
      %s190 = sphi 0, %s189
      %s204 = sphi 0, %s190
      %s208 = sphi 0, %s208
      %s210 = sphi 0, %s208
      %s211 = sphi 0, %s210
      %s225 = sphi 0, %s211
    $region4: #{tpu_custom_call.1} parent=1 // loop_header_branch
      %25 = sbr.rel (%p23) target = $region8
    $region5: #{tpu_custom_call.1} parent=1 // loop_body
      %s27 = ssub.s32 %s22, 1
      %s28 = ssub.s32 %s22, 2
      %s29 = sadd.s32 %s22, 1
      %s30 = ssub.s32 %s22, %s29
      %p31 = scmp.eq.s32.totalorder %s30, 0
      %s33 = sadd.s32 %s32, 1
      %s34 = scalar_select %p31, %s32, %s33
      %p37 = pneg %p31
      %p38 = scmp.eq.s32.totalorder %s22, 3
      %p39 = por %p37, %p38
      %p40 = scmp.ne.s32.totalorder %s32, %s35
      %p41 = scmp.eq.s32.totalorder %s22, 0
      %p42 = por %p40, %p41
      %p43 = scmp.ne.s32.totalorder %s32, %s35
      %p44 = scmp.eq.s32.totalorder %s27, 3
      %p45 = por %p43, %p44
      %p46 = scmp.ne.s32.totalorder %s35, %s36
      %p47 = scmp.eq.s32.totalorder %s27, 0
      %p48 = por %p46, %p47
      %p49 = scmp.ne.s32.totalorder %s35, %s36
      %p50 = scmp.eq.s32.totalorder %s28, 3
      %p51 = por %p49, %p50
      %p53 = scmp.ne.s32.totalorder %s36, %s52
      %p54 = scmp.eq.s32.totalorder %s28, 0
      %p55 = por %p53, %p54
      %s56 = ssub.s32 %s22, %s29
      %p57 = scmp.eq.s32.totalorder %s56, 0
      %s59 = sadd.s32 %s58, 1
      %s60 = scalar_select %p57, %s58, %s59
      %p63 = pneg %p57
      %p64 = scmp.eq.s32.totalorder %s22, 3
      %p65 = por %p63, %p64
      %p66 = scmp.ne.s32.totalorder %s58, %s61
      %p67 = scmp.eq.s32.totalorder %s22, 0
      %p68 = por %p66, %p67
      %p69 = scmp.ne.s32.totalorder %s58, %s61
      %p70 = scmp.eq.s32.totalorder %s27, 3
      %p71 = por %p69, %p70
      %p72 = scmp.ne.s32.totalorder %s61, %s62
      %p73 = scmp.eq.s32.totalorder %s27, 0
      %p74 = por %p72, %p73
      %p75 = scmp.ne.s32.totalorder %s61, %s62
      %p76 = scmp.eq.s32.totalorder %s28, 3
      %p77 = por %p75, %p76
      %p79 = scmp.ne.s32.totalorder %s62, %s78
      %p80 = scmp.eq.s32.totalorder %s28, 0
      %p81 = por %p79, %p80
      %s83 = sadd.s32 %s82, 1
      %p86 = scmp.eq.s32.totalorder %s22, 3
      %p87 = scmp.ne.s32.totalorder %s82, %s84
      %p88 = scmp.eq.s32.totalorder %s22, 0
      %p89 = por %p87, %p88
      %p90 = scmp.ne.s32.totalorder %s82, %s84
      %p91 = scmp.eq.s32.totalorder %s27, 3
      %p92 = por %p90, %p91
      %p93 = scmp.ne.s32.totalorder %s84, %s85
      %p94 = scmp.eq.s32.totalorder %s27, 0
      %p95 = por %p93, %p94
      %p96 = scmp.ne.s32.totalorder %s84, %s85
      %p97 = scmp.eq.s32.totalorder %s28, 3
      %p98 = por %p96, %p97
      %p100 = scmp.ne.s32.totalorder %s85, %s99
      %p101 = scmp.eq.s32.totalorder %s28, 0
      %p102 = por %p100, %p101
      %s104 = sadd.s32 %s103, 1
      %p107 = scmp.eq.s32.totalorder %s22, 3
      %p108 = scmp.ne.s32.totalorder %s103, %s105
      %p109 = scmp.eq.s32.totalorder %s22, 0
      %p110 = por %p108, %p109
      %p111 = scmp.ne.s32.totalorder %s103, %s105
      %p112 = scmp.eq.s32.totalorder %s27, 3
      %p113 = por %p111, %p112
      %p114 = scmp.ne.s32.totalorder %s105, %s106
      %p115 = scmp.eq.s32.totalorder %s27, 0
      %p116 = por %p114, %p115
      %p117 = scmp.ne.s32.totalorder %s105, %s106
      %p118 = scmp.eq.s32.totalorder %s28, 3
      %p119 = por %p117, %p118
      %p121 = scmp.ne.s32.totalorder %s106, %s120
      %p122 = scmp.eq.s32.totalorder %s28, 0
      %p123 = por %p121, %p122
      %s125 = sadd.s32 %s124, 1
      %p128 = scmp.eq.s32.totalorder %s22, 3
      %p129 = scmp.ne.s32.totalorder %s124, %s126
      %p130 = scmp.eq.s32.totalorder %s22, 0
      %p131 = por %p129, %p130
      %p132 = scmp.ne.s32.totalorder %s124, %s126
      %p133 = scmp.eq.s32.totalorder %s27, 3
      %p134 = por %p132, %p133
      %p135 = scmp.ne.s32.totalorder %s126, %s127
      %p136 = scmp.eq.s32.totalorder %s27, 0
      %p137 = por %p135, %p136
      %p138 = scmp.ne.s32.totalorder %s126, %s127
      %p139 = scmp.eq.s32.totalorder %s28, 3
      %p140 = por %p138, %p139
      %p142 = scmp.ne.s32.totalorder %s127, %s141
      %p143 = scmp.eq.s32.totalorder %s28, 0
      %p144 = por %p142, %p143
      %s146 = sadd.s32 %s145, 1
      %p149 = scmp.eq.s32.totalorder %s22, 3
      %p150 = scmp.ne.s32.totalorder %s145, %s147
      %p151 = scmp.eq.s32.totalorder %s22, 0
      %p152 = por %p150, %p151
      %p153 = scmp.ne.s32.totalorder %s145, %s147
      %p154 = scmp.eq.s32.totalorder %s27, 3
      %p155 = por %p153, %p154
      %p156 = scmp.ne.s32.totalorder %s147, %s148
      %p157 = scmp.eq.s32.totalorder %s27, 0
      %p158 = por %p156, %p157
      %p159 = scmp.ne.s32.totalorder %s147, %s148
      %p160 = scmp.eq.s32.totalorder %s28, 3
      %p161 = por %p159, %p160
      %p163 = scmp.ne.s32.totalorder %s148, %s162
      %p164 = scmp.eq.s32.totalorder %s28, 0
      %p165 = por %p163, %p164
      %s167 = sadd.s32 %s166, 1
      %p170 = scmp.eq.s32.totalorder %s22, 3
      %p171 = scmp.ne.s32.totalorder %s166, %s168
      %p172 = scmp.eq.s32.totalorder %s22, 0
      %p173 = por %p171, %p172
      %p174 = scmp.ne.s32.totalorder %s166, %s168
      %p175 = scmp.eq.s32.totalorder %s27, 3
      %p176 = por %p174, %p175
      %p177 = scmp.ne.s32.totalorder %s168, %s169
      %p178 = scmp.eq.s32.totalorder %s27, 0
      %p179 = por %p177, %p178
      %p180 = scmp.ne.s32.totalorder %s168, %s169
      %p181 = scmp.eq.s32.totalorder %s28, 3
      %p182 = por %p180, %p181
      %p184 = scmp.ne.s32.totalorder %s169, %s183
      %p185 = scmp.eq.s32.totalorder %s28, 0
      %p186 = por %p184, %p185
      %s188 = sadd.s32 %s187, 1
      %p191 = scmp.eq.s32.totalorder %s22, 3
      %p192 = scmp.ne.s32.totalorder %s187, %s189
      %p193 = scmp.eq.s32.totalorder %s22, 0
      %p194 = por %p192, %p193
      %p195 = scmp.ne.s32.totalorder %s187, %s189
      %p196 = scmp.eq.s32.totalorder %s27, 3
      %p197 = por %p195, %p196
      %p198 = scmp.ne.s32.totalorder %s189, %s190
      %p199 = scmp.eq.s32.totalorder %s27, 0
      %p200 = por %p198, %p199
      %p201 = scmp.ne.s32.totalorder %s189, %s190
      %p202 = scmp.eq.s32.totalorder %s28, 3
      %p203 = por %p201, %p202
      %p205 = scmp.ne.s32.totalorder %s190, %s204
      %p206 = scmp.eq.s32.totalorder %s28, 0
      %p207 = por %p205, %p206
      %s209 = sadd.s32 %s208, 1
      %p212 = scmp.eq.s32.totalorder %s22, 3
      %p213 = scmp.ne.s32.totalorder %s208, %s210
      %p214 = scmp.eq.s32.totalorder %s22, 0
      %p215 = por %p213, %p214
      %p216 = scmp.ne.s32.totalorder %s208, %s210
      %p217 = scmp.eq.s32.totalorder %s27, 3
      %p218 = por %p216, %p217
      %p219 = scmp.ne.s32.totalorder %s210, %s211
      %p220 = scmp.eq.s32.totalorder %s27, 0
      %p221 = por %p219, %p220
      %p222 = scmp.ne.s32.totalorder %s210, %s211
      %p223 = scmp.eq.s32.totalorder %s28, 3
      %p224 = por %p222, %p223
      %p226 = scmp.ne.s32.totalorder %s211, %s225
      %p227 = scmp.eq.s32.totalorder %s28, 0
      %p228 = por %p226, %p227
      %p229 = scmp.le.s32.totalorder 1, %s22
      %p230 = scmp.lt.s32.totalorder %s22, 5
      %p231 = pnand %p229, %p230
      %p232 = pneg %p231
      // Predicated region
      $region9: #{tpu_custom_call.1} parent=5 // pred_check
        _
      $region10: #{tpu_custom_call.1} parent=5 // pred_check_branch
        %234 = sbr.rel (%p231) target = $region12
      $region11: #{tpu_custom_call.1} parent=5 // pred_region
        %s235 = ssub.s32 %s22, 1
        // Predicated region
        $region13: #{tpu_custom_call.1} parent=11 // pred_check
          %p236 = pneg %p95
        $region14: #{tpu_custom_call.1} parent=11 // pred_check_branch
          %238 = sbr.rel (%p236) target = $region16
        $region15: #{tpu_custom_call.1} parent=11 // pred_region
          _
        $region16: #{tpu_custom_call.1} parent=11 // pred_fallthru
          _
        // Predicated region
        $region17: #{tpu_custom_call.1} parent=11 // pred_check
          %p239 = pneg %p116
        $region18: #{tpu_custom_call.1} parent=11 // pred_check_branch
          %241 = sbr.rel (%p239) target = $region20
        $region19: #{tpu_custom_call.1} parent=11 // pred_region
          _
        $region20: #{tpu_custom_call.1} parent=11 // pred_fallthru
          _
        // Predicated region
        $region21: #{tpu_custom_call.1} parent=11 // pred_check
          %p242 = pneg %p137
        $region22: #{tpu_custom_call.1} parent=11 // pred_check_branch
          %244 = sbr.rel (%p242) target = $region24
        $region23: #{tpu_custom_call.1} parent=11 // pred_region
          %s246 = ssub.s32 4096, 4096
          %247 = vsyncadd [#allocation7], %s246
          %s248 = sshll.u32 [#allocation8], 4
          %s249 = int_to_ptr.vmem [resolvable:$true] %s248
          %254 = dma.hbm_to_vmem [thread:$0]  %s4, 4096, %s249, [#allocation7], 128, 128, 8
        $region24: #{tpu_custom_call.1} parent=11 // pred_fallthru
          _
        // Predicated region
        $region25: #{tpu_custom_call.1} parent=11 // pred_check
          %p255 = pneg %p158
        $region26: #{tpu_custom_call.1} parent=11 // pred_check_branch
          %257 = sbr.rel (%p255) target = $region28
        $region27: #{tpu_custom_call.1} parent=11 // pred_region
          _
        $region28: #{tpu_custom_call.1} parent=11 // pred_fallthru
          _
        // Predicated region
        $region29: #{tpu_custom_call.1} parent=11 // pred_check
          %p258 = pneg %p179
        $region30: #{tpu_custom_call.1} parent=11 // pred_check_branch
          %260 = sbr.rel (%p258) target = $region32
        $region31: #{tpu_custom_call.1} parent=11 // pred_region
          %s262 = ssub.s32 2048, 2048
          %263 = vsyncadd [#allocation10], %s262
          %s264 = sshll.u32 [#allocation9], 4
          %s265 = int_to_ptr.vmem [resolvable:$true] %s264
          %270 = dma.hbm_to_vmem [thread:$0]  %s6, 2048, %s265, [#allocation10], 128, 128, 8
        $region32: #{tpu_custom_call.1} parent=11 // pred_fallthru
          _
        // Predicated region
        $region33: #{tpu_custom_call.1} parent=11 // pred_check
          %p271 = pneg %p200
        $region34: #{tpu_custom_call.1} parent=11 // pred_check_branch
          %273 = sbr.rel (%p271) target = $region36
        $region35: #{tpu_custom_call.1} parent=11 // pred_region
          _
        $region36: #{tpu_custom_call.1} parent=11 // pred_fallthru
          _
      $region12: #{tpu_custom_call.1} parent=5 // pred_fallthru
        _
      %p274 = scmp.lt.s32.totalorder %s22, 4
      // Predicated region
      $region37: #{tpu_custom_call.1} parent=5 // pred_check
        %p275 = pneg %p274
      $region38: #{tpu_custom_call.1} parent=5 // pred_check_branch
        %277 = sbr.rel (%p275) target = $region40
      $region39: #{tpu_custom_call.1} parent=5 // pred_region
        // Predicated region
        $region41: #{tpu_custom_call.1} parent=39 // pred_check
          %p278 = pneg %p42
        $region42: #{tpu_custom_call.1} parent=39 // pred_check_branch
          %280 = sbr.rel (%p278) target = $region44
        $region43: #{tpu_custom_call.1} parent=39 // pred_region
          %s281 = sand.u32 %s32, 1
          %s282 = scalar_lea.sflag [#allocation4], %s281
          %s283 = sand.u32 %s32, 1
          %s284 = smul.addr %s283, 16
          %s285 = scalar_lea.vmem [#allocation3], %s284
          %s286 = smul.u32 2, %s22
          %s288 = ssub.s32 256, 256
          %289 = vsyncadd %s282, %s288
          %s290 = smul.addr %s286, 128
          %s291 = scalar_lea.hbm %s0, %s290
          %s293 = sshll.u32 %s285, 4
          %s294 = int_to_ptr.vmem [resolvable:$true] %s293
          %296 = dma.hbm_to_vmem [thread:$0]  %s291, 256, %s294, %s282
        $region44: #{tpu_custom_call.1} parent=39 // pred_fallthru
          _
        // Predicated region
        $region45: #{tpu_custom_call.1} parent=39 // pred_check
          %p297 = pneg %p68
        $region46: #{tpu_custom_call.1} parent=39 // pred_check_branch
          %299 = sbr.rel (%p297) target = $region48
        $region47: #{tpu_custom_call.1} parent=39 // pred_region
          %s300 = sand.u32 %s22, 1
          %s301 = scalar_lea.sflag [#allocation7], %s300
          %s302 = sand.u32 %s58, 1
          %s303 = smul.addr %s302, 512
          %s304 = scalar_lea.vmem [#allocation6], %s303
          %s305 = smul.u32 32, %s22
          %s307 = ssub.s32 8192, 8192
          %308 = vsyncadd %s301, %s307
          %s309 = smul.addr %s305, 2
          %s310 = smul.addr %s309, 128
          %s311 = scalar_lea.hbm %s1, %s310
          %s312 = sshll.u32 %s304, 4
          %s313 = int_to_ptr.vmem [resolvable:$true] %s312
          %318 = dma.hbm_to_vmem [thread:$0]  %s311, 8192, %s313, %s301, 256, 256, 16
        $region48: #{tpu_custom_call.1} parent=39 // pred_fallthru
          _
      $region40: #{tpu_custom_call.1} parent=5 // pred_fallthru
        _
      %p319 = scmp.le.s32.totalorder 1, %s22
      %p320 = scmp.lt.s32.totalorder %s22, 5
      %p321 = pnand %p319, %p320
      %p322 = pneg %p321
      // Predicated region
      $region49: #{tpu_custom_call.1} parent=5 // pred_check
        _
      $region50: #{tpu_custom_call.1} parent=5 // pred_check_branch
        %324 = sbr.rel (%p321) target = $region52
      $region51: #{tpu_custom_call.1} parent=5 // pred_region
        %s325 = ssub.s32 %s22, 1
        %s326 = sand.u32 %s35, 1
        %s327 = scalar_lea.sflag [#allocation4], %s326
        %s328 = sand.u32 %s35, 1
        %s329 = smul.addr %s328, 16
        %s330 = scalar_lea.vmem [#allocation3], %s329
        // Predicated region
        $region53: #{tpu_custom_call.1} parent=51 // pred_check
          %p331 = pneg %p48
        $region54: #{tpu_custom_call.1} parent=51 // pred_check_branch
          %333 = sbr.rel (%p331) target = $region56
        $region55: #{tpu_custom_call.1} parent=51 // pred_region
          %334 = dma.done %s327, 256
        $region56: #{tpu_custom_call.1} parent=51 // pred_fallthru
          _
        %s335 = sand.u32 %s27, 1
        %s336 = scalar_lea.sflag [#allocation7], %s335
        %s337 = sand.u32 %s61, 1
        %s338 = smul.addr %s337, 512
        %s339 = scalar_lea.vmem [#allocation6], %s338
        // Predicated region
        $region57: #{tpu_custom_call.1} parent=51 // pred_check
          %p340 = pneg %p74
        $region58: #{tpu_custom_call.1} parent=51 // pred_check_branch
          %342 = sbr.rel (%p340) target = $region60
        $region59: #{tpu_custom_call.1} parent=51 // pred_region
          %343 = dma.done %s336, 8192
        $region60: #{tpu_custom_call.1} parent=51 // pred_fallthru
          _
        // Predicated region
        $region61: #{tpu_custom_call.1} parent=51 // pred_check
          %p344 = pneg %p137
        $region62: #{tpu_custom_call.1} parent=51 // pred_check_branch
          %346 = sbr.rel (%p344) target = $region64
        $region63: #{tpu_custom_call.1} parent=51 // pred_region
          %347 = dma.done [#allocation7], 4096
        $region64: #{tpu_custom_call.1} parent=51 // pred_fallthru
          _
        // Predicated region
        $region65: #{tpu_custom_call.1} parent=51 // pred_check
          %p348 = pneg %p179
        $region66: #{tpu_custom_call.1} parent=51 // pred_check_branch
          %350 = sbr.rel (%p348) target = $region68
        $region67: #{tpu_custom_call.1} parent=51 // pred_region
          %351 = dma.done [#allocation10], 2048
        $region68: #{tpu_custom_call.1} parent=51 // pred_fallthru
          _
        %s352 = sand.u32 %s35, 1
        %s353 = scalar_lea.sflag [#allocation4], %s352
        %s354 = sand.u32 %s35, 1
        %s355 = smul.addr %s354, 16
        %s356 = scalar_lea.vmem [#allocation3], %s355
        %p357 = pneg %p48
        %p358 = pneg %p45
        %s359 = sand.u32 %s27, 1
        %s360 = scalar_lea.sflag [#allocation7], %s359
        %s361 = sand.u32 %s61, 1
        %s362 = smul.addr %s361, 512
        %s363 = scalar_lea.vmem [#allocation6], %s362
        %p364 = pneg %p74
        %p365 = pneg %p71
        %p366 = pneg %p95
        %p367 = pneg %p92
        %p368 = pneg %p116
        %p369 = pneg %p113
        %p370 = pneg %p137
        %p371 = pneg %p134
        %p372 = pneg %p158
        %p373 = pneg %p155
        %p374 = pneg %p179
        %p375 = pneg %p176
        %p376 = pneg %p200
        %p377 = pneg %p197
        %p378 = pneg %p221
        %p379 = pneg %p218
        %s380 = smul.u32 2, %s27
        %s381 = smul.u32 32, %s27
        %p382 = scmp.eq.s32.totalorder %s27, 0
        // Predicated region
        $region69: #{tpu_custom_call.1} parent=51 // pred_check
          %p383 = pneg %p382
        $region70: #{tpu_custom_call.1} parent=51 // pred_check_branch
          %385 = sbr.rel (%p383) target = $region72
        $region71: #{tpu_custom_call.1} parent=51 // pred_region
          %386 = vst [vmem:[#allocation2] sm:$0xff] 0.0
          %387 = vst [vmem:[#allocation2 + $0x8] sm:$0xff] 0.0
        $region72: #{tpu_custom_call.1} parent=51 // pred_fallthru
          _
        %v388 = vld [vmem:[%s330] sm:$0xff]
        %v389 = vld [vmem:[%s330 + $0x8] sm:$0xff]
        %v390 = vld [vmem:[%s339] sm:$0xff]
        %v391 = vld [vmem:[%s339 + $0x8] sm:$0xff]
        %v392 = vld [vmem:[%s339 + $0x10] sm:$0xff]
        %v393 = vld [vmem:[%s339 + $0x18] sm:$0xff]
        %v394 = vld [vmem:[%s339 + $0x20] sm:$0xff]
        %v395 = vld [vmem:[%s339 + $0x28] sm:$0xff]
        %v396 = vld [vmem:[%s339 + $0x30] sm:$0xff]
        %v397 = vld [vmem:[%s339 + $0x38] sm:$0xff]
        %v398 = vld [vmem:[%s339 + $0x40] sm:$0xff]
        %v399 = vld [vmem:[%s339 + $0x48] sm:$0xff]
        %v400 = vld [vmem:[%s339 + $0x50] sm:$0xff]
        %v401 = vld [vmem:[%s339 + $0x58] sm:$0xff]
        %v402 = vld [vmem:[%s339 + $0x60] sm:$0xff]
        %v403 = vld [vmem:[%s339 + $0x68] sm:$0xff]
        %v404 = vld [vmem:[%s339 + $0x70] sm:$0xff]
        %v405 = vld [vmem:[%s339 + $0x78] sm:$0xff]
        %v406 = vld [vmem:[%s339 + $0x80] sm:$0xff]
        %v407 = vld [vmem:[%s339 + $0x88] sm:$0xff]
        %v408 = vld [vmem:[%s339 + $0x90] sm:$0xff]
        %v409 = vld [vmem:[%s339 + $0x98] sm:$0xff]
        %v410 = vld [vmem:[%s339 + $0xa0] sm:$0xff]
        %v411 = vld [vmem:[%s339 + $0xa8] sm:$0xff]
        %v412 = vld [vmem:[%s339 + $0xb0] sm:$0xff]
        %v413 = vld [vmem:[%s339 + $0xb8] sm:$0xff]
        %v414 = vld [vmem:[%s339 + $0xc0] sm:$0xff]
        %v415 = vld [vmem:[%s339 + $0xc8] sm:$0xff]
        %v416 = vld [vmem:[%s339 + $0xd0] sm:$0xff]
        %v417 = vld [vmem:[%s339 + $0xd8] sm:$0xff]
        %v418 = vld [vmem:[%s339 + $0xe0] sm:$0xff]
        %v419 = vld [vmem:[%s339 + $0xe8] sm:$0xff]
        %v420 = vld [vmem:[%s339 + $0xf0] sm:$0xff]
        %v421 = vld [vmem:[%s339 + $0xf8] sm:$0xff]
        %v422 = vld [vmem:[%s339 + $0x100] sm:$0xff]
        %v423 = vld [vmem:[%s339 + $0x108] sm:$0xff]
        %v424 = vld [vmem:[%s339 + $0x110] sm:$0xff]
        %v425 = vld [vmem:[%s339 + $0x118] sm:$0xff]
        %v426 = vld [vmem:[%s339 + $0x120] sm:$0xff]
        %v427 = vld [vmem:[%s339 + $0x128] sm:$0xff]
        %v428 = vld [vmem:[%s339 + $0x130] sm:$0xff]
        %v429 = vld [vmem:[%s339 + $0x138] sm:$0xff]
        %v430 = vld [vmem:[%s339 + $0x140] sm:$0xff]
        %v431 = vld [vmem:[%s339 + $0x148] sm:$0xff]
        %v432 = vld [vmem:[%s339 + $0x150] sm:$0xff]
        %v433 = vld [vmem:[%s339 + $0x158] sm:$0xff]
        %v434 = vld [vmem:[%s339 + $0x160] sm:$0xff]
        %v435 = vld [vmem:[%s339 + $0x168] sm:$0xff]
        %v436 = vld [vmem:[%s339 + $0x170] sm:$0xff]
        %v437 = vld [vmem:[%s339 + $0x178] sm:$0xff]
        %v438 = vld [vmem:[%s339 + $0x180] sm:$0xff]
        %v439 = vld [vmem:[%s339 + $0x188] sm:$0xff]
        %v440 = vld [vmem:[%s339 + $0x190] sm:$0xff]
        %v441 = vld [vmem:[%s339 + $0x198] sm:$0xff]
        %v442 = vld [vmem:[%s339 + $0x1a0] sm:$0xff]
        %v443 = vld [vmem:[%s339 + $0x1a8] sm:$0xff]
        %v444 = vld [vmem:[%s339 + $0x1b0] sm:$0xff]
        %v445 = vld [vmem:[%s339 + $0x1b8] sm:$0xff]
        %v446 = vld [vmem:[%s339 + $0x1c0] sm:$0xff]
        %v447 = vld [vmem:[%s339 + $0x1c8] sm:$0xff]
        %v448 = vld [vmem:[%s339 + $0x1d0] sm:$0xff]
        %v449 = vld [vmem:[%s339 + $0x1d8] sm:$0xff]
        %v450 = vld [vmem:[%s339 + $0x1e0] sm:$0xff]
        %v451 = vld [vmem:[%s339 + $0x1e8] sm:$0xff]
        %v452 = vld [vmem:[%s339 + $0x1f0] sm:$0xff]
        %v453 = vld [vmem:[%s339 + $0x1f8] sm:$0xff]
        %v454 = vld [vmem:[#allocation2] sm:$0xff]
        %v455 = vld [vmem:[#allocation2 + $0x8] sm:$0xff]
        %456 = vmatprep.subr.mxu0 %v391
        %457 = vmatpush1.msra.mxu0 %v390
        %458 = vmatprep.subr.mxu0 %v393
        %459 = vmatpush1.msra.mxu0 %v392
        %460 = vmatprep.subr.mxu0 %v395
        %461 = vmatpush1.msra.mxu0 %v394
        %462 = vmatprep.subr.mxu0 %v397
        %463 = vmatpush1.msra.mxu0 %v396
        %464 = vmatprep.subr.mxu0 %v399
        %465 = vmatpush1.msra.mxu0 %v398
        %466 = vmatprep.subr.mxu0 %v401
        %467 = vmatpush1.msra.mxu0 %v400
        %468 = vmatprep.subr.mxu0 %v403
        %469 = vmatpush1.msra.mxu0 %v402
        %470 = vmatprep.subr.mxu0 %v405
        %471 = vmatpush1.msra.mxu0 %v404
        %472 = vmatprep.subr.mxu0 %v407
        %473 = vmatpush1.msra.mxu0 %v406
        %474 = vmatprep.subr.mxu0 %v409
        %475 = vmatpush1.msra.mxu0 %v408
        %476 = vmatprep.subr.mxu0 %v411
        %477 = vmatpush1.msra.mxu0 %v410
        %478 = vmatprep.subr.mxu0 %v413
        %479 = vmatpush1.msra.mxu0 %v412
        %480 = vmatprep.subr.mxu0 %v415
        %481 = vmatpush1.msra.mxu0 %v414
        %482 = vmatprep.subr.mxu0 %v417
        %483 = vmatpush1.msra.mxu0 %v416
        %484 = vmatprep.subr.mxu0 %v419
        %485 = vmatpush1.msra.mxu0 %v418
        %486 = vmatprep.subr.mxu0 %v421
        %487 = vmatpush1.msra.mxu0 %v420
        %488 = vmatprep.subr.mxu0 %v423
        %489 = vmatpush1.msra.mxu0 %v422
        %490 = vmatprep.subr.mxu0 %v425
        %491 = vmatpush1.msra.mxu0 %v424
        %492 = vmatprep.subr.mxu0 %v427
        %493 = vmatpush1.msra.mxu0 %v426
        %494 = vmatprep.subr.mxu0 %v429
        %495 = vmatpush1.msra.mxu0 %v428
        %496 = vmatprep.subr.mxu0 %v431
        %497 = vmatpush1.msra.mxu0 %v430
        %498 = vmatprep.subr.mxu0 %v433
        %499 = vmatpush1.msra.mxu0 %v432
        %500 = vmatprep.subr.mxu0 %v435
        %501 = vmatpush1.msra.mxu0 %v434
        %502 = vmatprep.subr.mxu0 %v437
        %503 = vmatpush1.msra.mxu0 %v436
        %504 = vmatprep.subr.mxu0 %v439
        %505 = vmatpush1.msra.mxu0 %v438
        %506 = vmatprep.subr.mxu0 %v441
        %507 = vmatpush1.msra.mxu0 %v440
        %508 = vmatprep.subr.mxu0 %v443
        %509 = vmatpush1.msra.mxu0 %v442
        %510 = vmatprep.subr.mxu0 %v445
        %511 = vmatpush1.msra.mxu0 %v444
        %512 = vmatprep.subr.mxu0 %v447
        %513 = vmatpush1.msra.mxu0 %v446
        %514 = vmatprep.subr.mxu0 %v449
        %515 = vmatpush1.msra.mxu0 %v448
        %516 = vmatprep.subr.mxu0 %v451
        %517 = vmatpush1.msra.mxu0 %v450
        %518 = vmatprep.subr.mxu0 %v453
        %519 = vmatpush1.msra.mxu0 %v452
        %520 = vmatprep.mubr.f32.mxu0 %v389
        %521 = vmatmul.mubr.f32.gmra.mrb[0].mxu0 %v388
        %v522 = vpop.f32.mrb[0].mxu0
        %v523 = vadd.f32 0.0, %v522
        %v524 = vpop.f32.mrb[0].mxu0
        %v525 = vadd.f32 0.0, %v524
        %526 = vdwg.mxu0
        %v527 = vadd.f32 %v454, %v523
        %v528 = vadd.f32 %v455, %v525
        %529 = vst [vmem:[#allocation2] sm:$0xff] %v527
        %530 = vst [vmem:[#allocation2 + $0x8] sm:$0xff] %v528
        %p531 = scmp.eq.s32.totalorder %s27, 3
        // Predicated region
        $region73: #{tpu_custom_call.1} parent=51 // pred_check
          %p532 = pneg %p531
        $region74: #{tpu_custom_call.1} parent=51 // pred_check_branch
          %534 = sbr.rel (%p532) target = $region76
        $region75: #{tpu_custom_call.1} parent=51 // pred_region
          %v535 = vld [vmem:[#allocation2] sm:$0xff]
          %v536 = vld [vmem:[#allocation2 + $0x8] sm:$0xff]
          %v537 = vld [vmem:[%s2] sm:$0x3]
          %v539 = vlaneseq
          %v540 = vshrl.u32 %v539, 7
          %v541 = vsub.s32 0, %v540
          %v542 = vrot.slane %v537, %v541
          %v543 = vlaneseq
          %v544 = vshrl.u32 %v543, 7
          %v545 = vsub.s32 1, %v544
          %v546 = vrot.slane %v537, %v545
          %v549 = vmul.f32 %v535, %v542
          %v550 = vmul.f32 %v536, %v546
          %v551 = vld [vmem:[%s3] sm:$0x3]
          %v553 = vlaneseq
          %v554 = vshrl.u32 %v553, 7
          %v555 = vsub.s32 0, %v554
          %v556 = vrot.slane %v551, %v555
          %v557 = vlaneseq
          %v558 = vshrl.u32 %v557, 7
          %v559 = vsub.s32 1, %v558
          %v560 = vrot.slane %v551, %v559
          %v563 = vadd.f32 %v549, %v556
          %v564 = vadd.f32 %v550, %v560
          %v565 = vmax.f32 %v563, %v564
          %566 = vmax.xlane.f32.xlu0 %v565
          %v567 = vpop.xlane.xlu0 %566
          %v568 = vsub.f32 %v563, %v567
          %v569 = vsub.f32 %v564, %v567
          %v570 = vmul.f32 %v568, 1.442695
          %v571 = vpow.pop %v570
          %v572 = vmul.f32 %v569, 1.442695
          %v573 = vpow.pop %v572
          %v574 = vadd.f32 %v571, %v573
          %575 = vadd.xlane.f32.xlu0 %v574
          %v576 = vpop.xlane.xlu0 %575
          %v577 = vrcp.pop %v576
          %v578 = vmul.f32 %v571, %v577
          %v579 = vmul.f32 %v573, %v577
          %v580 = vld [vmem:[#allocation8] sm:$0xff]
          %v581 = vld [vmem:[#allocation8 + $0x8] sm:$0xff]
          %v582 = vld [vmem:[#allocation8 + $0x10] sm:$0xff]
          %v583 = vld [vmem:[#allocation8 + $0x18] sm:$0xff]
          %v584 = vld [vmem:[#allocation8 + $0x20] sm:$0xff]
          %v585 = vld [vmem:[#allocation8 + $0x28] sm:$0xff]
          %v586 = vld [vmem:[#allocation8 + $0x30] sm:$0xff]
          %v587 = vld [vmem:[#allocation8 + $0x38] sm:$0xff]
          %v588 = vld [vmem:[#allocation8 + $0x40] sm:$0xff]
          %v589 = vld [vmem:[#allocation8 + $0x48] sm:$0xff]
          %v590 = vld [vmem:[#allocation8 + $0x50] sm:$0xff]
          %v591 = vld [vmem:[#allocation8 + $0x58] sm:$0xff]
          %v592 = vld [vmem:[#allocation8 + $0x60] sm:$0xff]
          %v593 = vld [vmem:[#allocation8 + $0x68] sm:$0xff]
          %v594 = vld [vmem:[#allocation8 + $0x70] sm:$0xff]
          %v595 = vld [vmem:[#allocation8 + $0x78] sm:$0xff]
          %v596 = vld [vmem:[#allocation8 + $0x80] sm:$0xff]
          %v597 = vld [vmem:[#allocation8 + $0x88] sm:$0xff]
          %v598 = vld [vmem:[#allocation8 + $0x90] sm:$0xff]
          %v599 = vld [vmem:[#allocation8 + $0x98] sm:$0xff]
          %v600 = vld [vmem:[#allocation8 + $0xa0] sm:$0xff]
          %v601 = vld [vmem:[#allocation8 + $0xa8] sm:$0xff]
          %v602 = vld [vmem:[#allocation8 + $0xb0] sm:$0xff]
          %v603 = vld [vmem:[#allocation8 + $0xb8] sm:$0xff]
          %v604 = vld [vmem:[#allocation8 + $0xc0] sm:$0xff]
          %v605 = vld [vmem:[#allocation8 + $0xc8] sm:$0xff]
          %v606 = vld [vmem:[#allocation8 + $0xd0] sm:$0xff]
          %v607 = vld [vmem:[#allocation8 + $0xd8] sm:$0xff]
          %v608 = vld [vmem:[#allocation8 + $0xe0] sm:$0xff]
          %v609 = vld [vmem:[#allocation8 + $0xe8] sm:$0xff]
          %v610 = vld [vmem:[#allocation8 + $0xf0] sm:$0xff]
          %v611 = vld [vmem:[#allocation8 + $0xf8] sm:$0xff]
          %v612 = vld [vmem:[%s5] sm:$0x1]
          %v614 = vlaneseq
          %v615 = vshrl.u32 %v614, 7
          %v616 = vsub.s32 0, %v615
          %v617 = vrot.slane %v612, %v616
          %619 = vmatprep.subr.mxu0 0.0
          %620 = vmatpush1.msra.mxu0 %v580
          %621 = vmatprep.subr.mxu0 0.0
          %622 = vmatpush1.msra.mxu0 %v581
          %623 = vmatprep.subr.mxu0 0.0
          %624 = vmatpush1.msra.mxu0 %v582
          %625 = vmatprep.subr.mxu0 0.0
          %626 = vmatpush1.msra.mxu0 %v583
          %627 = vmatprep.subr.mxu0 0.0
          %628 = vmatpush1.msra.mxu0 %v584
          %629 = vmatprep.subr.mxu0 0.0
          %630 = vmatpush1.msra.mxu0 %v585
          %631 = vmatprep.subr.mxu0 0.0
          %632 = vmatpush1.msra.mxu0 %v586
          %633 = vmatprep.subr.mxu0 0.0
          %634 = vmatpush1.msra.mxu0 %v587
          %635 = vmatprep.subr.mxu0 0.0
          %636 = vmatpush1.msra.mxu0 %v588
          %637 = vmatprep.subr.mxu0 0.0
          %638 = vmatpush1.msra.mxu0 %v589
          %639 = vmatprep.subr.mxu0 0.0
          %640 = vmatpush1.msra.mxu0 %v590
          %641 = vmatprep.subr.mxu0 0.0
          %642 = vmatpush1.msra.mxu0 %v591
          %643 = vmatprep.subr.mxu0 0.0
          %644 = vmatpush1.msra.mxu0 %v592
          %645 = vmatprep.subr.mxu0 0.0
          %646 = vmatpush1.msra.mxu0 %v593
          %647 = vmatprep.subr.mxu0 0.0
          %648 = vmatpush1.msra.mxu0 %v594
          %649 = vmatprep.subr.mxu0 0.0
          %650 = vmatpush1.msra.mxu0 %v595
          %651 = vmatprep.subr.mxu0 0.0
          %652 = vmatpush1.msra.mxu0 %v596
          %653 = vmatprep.subr.mxu0 0.0
          %654 = vmatpush1.msra.mxu0 %v597
          %655 = vmatprep.subr.mxu0 0.0
          %656 = vmatpush1.msra.mxu0 %v598
          %657 = vmatprep.subr.mxu0 0.0
          %658 = vmatpush1.msra.mxu0 %v599
          %659 = vmatprep.subr.mxu0 0.0
          %660 = vmatpush1.msra.mxu0 %v600
          %661 = vmatprep.subr.mxu0 0.0
          %662 = vmatpush1.msra.mxu0 %v601
          %663 = vmatprep.subr.mxu0 0.0
          %664 = vmatpush1.msra.mxu0 %v602
          %665 = vmatprep.subr.mxu0 0.0
          %666 = vmatpush1.msra.mxu0 %v603
          %667 = vmatprep.subr.mxu0 0.0
          %668 = vmatpush1.msra.mxu0 %v604
          %669 = vmatprep.subr.mxu0 0.0
          %670 = vmatpush1.msra.mxu0 %v605
          %671 = vmatprep.subr.mxu0 0.0
          %672 = vmatpush1.msra.mxu0 %v606
          %673 = vmatprep.subr.mxu0 0.0
          %674 = vmatpush1.msra.mxu0 %v607
          %675 = vmatprep.subr.mxu0 0.0
          %676 = vmatpush1.msra.mxu0 %v608
          %677 = vmatprep.subr.mxu0 0.0
          %678 = vmatpush1.msra.mxu0 %v609
          %679 = vmatprep.subr.mxu0 0.0
          %680 = vmatpush1.msra.mxu0 %v610
          %681 = vmatprep.subr.mxu0 0.0
          %682 = vmatpush1.msra.mxu0 %v611
          %683 = vmatprep.mubr.f32.mxu0 %v579
          %684 = vmatmul.mubr.f32.gmra.mrb[0].mxu0 %v578
          %v685 = vpop.f32.mrb[0].mxu0
          %v686 = vadd.f32 %v617, %v685
          %v687 = vpop.f32.mrb[0].mxu0
          %688 = vdwg.mxu0
          %689 = vmax.xlane.f32.xlu0 %v686
          %v690 = vpop.xlane.xlu0 %689
          %v691 = vsub.f32 %v686, %v690
          %v692 = vmul.f32 %v691, 1.442695
          %v693 = vpow.pop %v692
          %694 = vadd.xlane.f32.xlu0 %v693
          %v695 = vpop.xlane.xlu0 %694
          %v696 = vrcp.pop %v695
          %v697 = vmul.f32 %v693, %v696
          %v698 = vld [vmem:[#allocation9] sm:$0xff]
          %v699 = vld [vmem:[#allocation9 + $0x8] sm:$0xff]
          %v700 = vld [vmem:[#allocation9 + $0x10] sm:$0xff]
          %v701 = vld [vmem:[#allocation9 + $0x18] sm:$0xff]
          %v702 = vld [vmem:[#allocation9 + $0x20] sm:$0xff]
          %v703 = vld [vmem:[#allocation9 + $0x28] sm:$0xff]
          %v704 = vld [vmem:[#allocation9 + $0x30] sm:$0xff]
          %v705 = vld [vmem:[#allocation9 + $0x38] sm:$0xff]
          %v706 = vld [vmem:[#allocation9 + $0x40] sm:$0xff]
          %v707 = vld [vmem:[#allocation9 + $0x48] sm:$0xff]
          %v708 = vld [vmem:[#allocation9 + $0x50] sm:$0xff]
          %v709 = vld [vmem:[#allocation9 + $0x58] sm:$0xff]
          %v710 = vld [vmem:[#allocation9 + $0x60] sm:$0xff]
          %v711 = vld [vmem:[#allocation9 + $0x68] sm:$0xff]
          %v712 = vld [vmem:[#allocation9 + $0x70] sm:$0xff]
          %v713 = vld [vmem:[#allocation9 + $0x78] sm:$0xff]
          %v714 = vld [vmem:[%s7] sm:$0x1]
          %v716 = vlaneseq
          %v717 = vshrl.u32 %v716, 7
          %v718 = vsub.s32 0, %v717
          %v719 = vrot.slane %v714, %v718
          %721 = vmatprep.subr.mxu0 0.0
          %722 = vmatpush1.msra.mxu0 %v698
          %723 = vmatprep.subr.mxu0 0.0
          %724 = vmatpush1.msra.mxu0 %v699
          %725 = vmatprep.subr.mxu0 0.0
          %726 = vmatpush1.msra.mxu0 %v700
          %727 = vmatprep.subr.mxu0 0.0
          %728 = vmatpush1.msra.mxu0 %v701
          %729 = vmatprep.subr.mxu0 0.0
          %730 = vmatpush1.msra.mxu0 %v702
          %731 = vmatprep.subr.mxu0 0.0
          %732 = vmatpush1.msra.mxu0 %v703
          %733 = vmatprep.subr.mxu0 0.0
          %734 = vmatpush1.msra.mxu0 %v704
          %735 = vmatprep.subr.mxu0 0.0
          %736 = vmatpush1.msra.mxu0 %v705
          %737 = vmatprep.subr.mxu0 0.0
          %738 = vmatpush1.msra.mxu0 %v706
          %739 = vmatprep.subr.mxu0 0.0
          %740 = vmatpush1.msra.mxu0 %v707
          %741 = vmatprep.subr.mxu0 0.0
          %742 = vmatpush1.msra.mxu0 %v708
          %743 = vmatprep.subr.mxu0 0.0
          %744 = vmatpush1.msra.mxu0 %v709
          %745 = vmatprep.subr.mxu0 0.0
          %746 = vmatpush1.msra.mxu0 %v710
          %747 = vmatprep.subr.mxu0 0.0
          %748 = vmatpush1.msra.mxu0 %v711
          %749 = vmatprep.subr.mxu0 0.0
          %750 = vmatpush1.msra.mxu0 %v712
          %751 = vmatprep.subr.mxu0 0.0
          %752 = vmatpush1.msra.mxu0 %v713
          %753 = vmatprep.subr.mxu0 0.0
          %754 = vmatpush1.msra.mxu0 0.0
          %755 = vmatprep.subr.mxu0 0.0
          %756 = vmatpush1.msra.mxu0 0.0
          %757 = vmatprep.subr.mxu0 0.0
          %758 = vmatpush1.msra.mxu0 0.0
          %759 = vmatprep.subr.mxu0 0.0
          %760 = vmatpush1.msra.mxu0 0.0
          %761 = vmatprep.subr.mxu0 0.0
          %762 = vmatpush1.msra.mxu0 0.0
          %763 = vmatprep.subr.mxu0 0.0
          %764 = vmatpush1.msra.mxu0 0.0
          %765 = vmatprep.subr.mxu0 0.0
          %766 = vmatpush1.msra.mxu0 0.0
          %767 = vmatprep.subr.mxu0 0.0
          %768 = vmatpush1.msra.mxu0 0.0
          %769 = vmatprep.subr.mxu0 0.0
          %770 = vmatpush1.msra.mxu0 0.0
          %771 = vmatprep.subr.mxu0 0.0
          %772 = vmatpush1.msra.mxu0 0.0
          %773 = vmatprep.subr.mxu0 0.0
          %774 = vmatpush1.msra.mxu0 0.0
          %775 = vmatprep.subr.mxu0 0.0
          %776 = vmatpush1.msra.mxu0 0.0
          %777 = vmatprep.subr.mxu0 0.0
          %778 = vmatpush1.msra.mxu0 0.0
          %779 = vmatprep.subr.mxu0 0.0
          %780 = vmatpush1.msra.mxu0 0.0
          %781 = vmatprep.subr.mxu0 0.0
          %782 = vmatpush1.msra.mxu0 0.0
          %783 = vmatprep.subr.mxu0 0.0
          %784 = vmatpush1.msra.mxu0 0.0
          %785 = vmatprep.mubr.f32.mxu0 0.0
          %786 = vmatmul.mubr.f32.gmra.mrb[0].mxu0 %v697
          %v787 = vpop.f32.mrb[0].mxu0
          %v788 = vadd.f32 %v719, %v787
          %v789 = vpop.f32.mrb[0].mxu0
          %790 = vdwg.mxu0
          %791 = vmax.xlane.f32.xlu0 %v788
          %v792 = vpop.xlane.xlu0 %791
          %v793 = vsub.f32 %v788, %v792
          %v794 = vmul.f32 %v793, 1.442695
          %v795 = vpow.pop %v794
          %796 = vadd.xlane.f32.xlu0 %v795
          %v797 = vpop.xlane.xlu0 %796
          %v798 = vrcp.pop %v797
          %v799 = vmul.f32 %v795, %v798
          %800 = vst [vmem:[#allocation11] sm:$0xff] %v799
        $region76: #{tpu_custom_call.1} parent=51 // pred_fallthru
          _
        // Predicated region
        $region77: #{tpu_custom_call.1} parent=51 // pred_check
          %p801 = pneg %p218
        $region78: #{tpu_custom_call.1} parent=51 // pred_check_branch
          %803 = sbr.rel (%p801) target = $region80
        $region79: #{tpu_custom_call.1} parent=51 // pred_region
          %s805 = ssub.s32 128, 128
          %806 = vsyncadd [#allocation5], %s805
          %s808 = sshll.u32 [#allocation11], 4
          %s809 = int_to_ptr.vmem [resolvable:$true] %s808
          %811 = dma.vmem_to_hbm [thread:$0]  %s809, 128, %s8, [#allocation5]
        $region80: #{tpu_custom_call.1} parent=51 // pred_fallthru
          _
        // Predicated region
        $region81: #{tpu_custom_call.1} parent=51 // pred_check
          %p812 = pneg %p218
        $region82: #{tpu_custom_call.1} parent=51 // pred_check_branch
          %814 = sbr.rel (%p812) target = $region84
        $region83: #{tpu_custom_call.1} parent=51 // pred_region
          %815 = dma.done [#allocation5], 128
        $region84: #{tpu_custom_call.1} parent=51 // pred_fallthru
          _
      $region52: #{tpu_custom_call.1} parent=5 // pred_fallthru
        _
      %p816 = scmp.le.s32.totalorder 2, %s22
      // Predicated region
      $region85: #{tpu_custom_call.1} parent=5 // pred_check
        %p817 = pneg %p816
      $region86: #{tpu_custom_call.1} parent=5 // pred_check_branch
        %819 = sbr.rel (%p817) target = $region88
      $region87: #{tpu_custom_call.1} parent=5 // pred_region
        %s820 = ssub.s32 %s22, 2
      $region88: #{tpu_custom_call.1} parent=5 // pred_fallthru
        _
    $region6: #{tpu_custom_call.1} parent=1 // loop_footer
      %s26 = sadd.s32 1, %s22
    $region7: #{tpu_custom_call.1} parent=1 // loop_footer_branch
      %21 = sbr.rel target = $region3
    $region8: #{tpu_custom_call.1} parent=1 // loop_exit
      _
    %821 = vsyncpa [#allocation4], 1
    %s822 = scalar_lea.sflag [#allocation4], 1
    %823 = vsyncpa %s822, 1
    %824 = vsyncpa [#allocation7], 1
    %s825 = scalar_lea.sflag [#allocation7], 1
    %826 = vsyncpa %s825, 1
    %827 = vsyncpa [#allocation10], 1
    %828 = vsyncpa [#allocation5], 1
    %s829 = scalar_lea.sflag [#allocation5], 1
    %830 = vsyncpa %s829, 1

</llo_original>
